<compile_context>
chip_gen: v7x
topology: tpu7x:2x2x1
jax: 0.10.0
libtpu: 0.0.40
codegen_flags: <defaults>
</compile_context>

<pallas_src>
import functools

import jax
import jax.numpy as jnp
from jax.experimental import pallas as pl
from jax.experimental.pallas import tpu as pltpu


def _init_cond_enc_kernel(x_ref, o_ref, *, tile_t: int, embed_len: int):
    """x_ref / o_ref: (tile_t, B*D) lane-dense flattened blocks."""
    # Sequence index of every row (sublane) in this block.
    t0 = (pl.program_id(0) * tile_t).astype(jnp.float32)
    row = jax.lax.broadcasted_iota(jnp.int32, (tile_t, 1), 0).astype(jnp.float32) + t0
    # position[t] = 1 - 0.5 * t / embed_len  (constant along B*D, so it is
    # never streamed from HBM -- computed on otherwise-idle VPU slots).
    scale = 1.0 - 0.5 * row / jnp.float32(embed_len)          # (tile_t, 1) f32
    x = x_ref[...].astype(jnp.float32)
    o_ref[...] = (x * scale).astype(o_ref.dtype)


def _choose_tile_t(T: int, bd: int, itemsize: int,
                   target_bytes: int = 2 << 20) -> int:
    """Largest multiple-of-8 divisor of T with block bytes <= ~2 MiB.

    Keeps >= 2 grid steps when T allows so the "parallel" axis can shard
    across TensorCores (v7x megacore); small blocks also stay well inside the
    v5e 16 MiB scoped-VMEM default with double buffering."""
    if T % 8 != 0:
        return T  # only the full extent is a legal block along this dim
    best = 8
    for cand in range(8, T + 1, 8):
        if T % cand != 0:
            continue
        if cand * bd * itemsize > target_bytes:
            continue
        if T >= 16 and cand == T:
            continue  # keep at least two grid steps for megacore
        best = cand
    return best


def init_conditional_encoding(init: jnp.ndarray, *, embed_len: int = 90,
                              tile_t: int | None = None) -> jnp.ndarray:
    """init: (T, B, d_init). Returns init * position[:T][:, None, :].

    Eval-mode forward of InitConditionalEncoding (dropout == identity).
    """
    T, B, D = init.shape
    assert T <= embed_len, "sequence length exceeds embed_len"

    bd = B * D
    x2d = init.reshape(T, bd)  # lane-dense: B*D sits on the lane axis

    if tile_t is None:
        tile_t = _choose_tile_t(T, bd, x2d.dtype.itemsize)
    assert T % tile_t == 0, "tile_t must divide T"
    assert tile_t == T or tile_t % 8 == 0, "tile_t must be a multiple of 8"
    grid = (T // tile_t,)

    kernel = functools.partial(_init_cond_enc_kernel,
                               tile_t=tile_t, embed_len=embed_len)

    out2d = pl.pallas_call(
        kernel,
        out_shape=jax.ShapeDtypeStruct((T, bd), init.dtype),
        grid_spec=pltpu.PrefetchScalarGridSpec(
            num_scalar_prefetch=0,
            grid=grid,
            in_specs=[pl.BlockSpec((tile_t, bd), lambda i: (i, 0))],
            out_specs=pl.BlockSpec((tile_t, bd), lambda i: (i, 0)),
        ),
        compiler_params=pltpu.CompilerParams(
            dimension_semantics=("parallel",)),
    )(x2d)

    return out2d.reshape(T, B, D)


def make_position(embed_len: int, d_init: int) -> jnp.ndarray:
    """PyTorch-identical 'position' buffer (used only for the reference check)."""
    p = jnp.arange(embed_len, dtype=jnp.float32)
    p = 1.0 - 0.5 * p / float(embed_len)
    return jnp.broadcast_to(p[:, None], (embed_len, d_init))


if __name__ == "__main__":
    # Module defaults: d_init=64, embed_len=90; small T, B for the test.
    d_init, embed_len = 64, 90
    T, B = 8, 2

    key = jax.random.PRNGKey(0)
    init = jax.random.normal(key, (T, B, d_init), dtype=jnp.float32)

    out = init_conditional_encoding(init, embed_len=embed_len)
    out = jax.block_until_ready(out)

    # Reference in plain JAX (eval-mode dropout == identity).
    position = make_position(embed_len, d_init)
    ref = init * position[:T][:, None, :]
    assert out.shape == (T, B, d_init)
    assert jnp.allclose(out, ref, atol=1e-6, rtol=1e-6)

    print("KERNEL_OK")
</pallas_src>

<mosaic_0001>
module attributes {stable_mosaic.version = 11 : i64} {
  func.func @_init_cond_enc_kernel(%arg0: i32, %arg1: memref<8x128xf32, #tpu.memory_space<vmem>>, %arg2: memref<8x128xf32, #tpu.memory_space<vmem>>) attributes {dimension_semantics = [#tpu.dimension_semantics<parallel>], iteration_bounds = array<i64: 1>, scalar_prefetch = 0 : i64, scratch_operands = 0 : i64, tpu.core_type = #tpu.core_type<tc>, window_params = [{transform_indices = @transform_0, window_bounds = array<i64: 8, 128>}, {transform_indices = @transform_1, window_bounds = array<i64: 8, 128>}]} {
    %c8_i32 = arith.constant 8 : i32
    %0 = arith.muli %arg0, %c8_i32 : i32
    %1 = arith.sitofp %0 : i32 to f32
    %2 = tpu.iota {dimensions = array<i32: 0>} : vector<8x1xi32>
    %3 = arith.sitofp %2 : vector<8x1xi32> to vector<8x1xf32>
    %4 = vector.broadcast %1 : f32 to vector<8x1xf32>
    %5 = arith.addf %3, %4 : vector<8x1xf32>
    %cst = arith.constant 5.000000e-01 : f32
    %6 = vector.broadcast %cst : f32 to vector<8x1xf32>
    %7 = arith.mulf %6, %5 : vector<8x1xf32>
    %cst_0 = arith.constant 9.000000e+01 : f32
    %8 = vector.broadcast %cst_0 : f32 to vector<8x1xf32>
    %9 = arith.divf %7, %8 : vector<8x1xf32>
    %cst_1 = arith.constant 1.000000e+00 : f32
    %10 = vector.broadcast %cst_1 : f32 to vector<8x1xf32>
    %11 = arith.subf %10, %9 : vector<8x1xf32>
    %c0 = arith.constant 0 : index
    %c0_2 = arith.constant 0 : index
    %12 = vector.load %arg1[%c0, %c0_2] : memref<8x128xf32, #tpu.memory_space<vmem>>, vector<8x128xf32>
    %13 = vector.broadcast %11 : vector<8x1xf32> to vector<8x128xf32>
    %14 = arith.mulf %12, %13 : vector<8x128xf32>
    %c0_3 = arith.constant 0 : index
    %c0_4 = arith.constant 0 : index
    %15 = vector.load %arg2[%c0_3, %c0_4] : memref<8x128xf32, #tpu.memory_space<vmem>>, vector<8x128xf32>
    tpu.vector_store %arg2[%c0_3, %c0_4], %14 {strides = array<i32>} : memref<8x128xf32, #tpu.memory_space<vmem>>, vector<8x128xf32>,
    return
  }
  func.func @transform_0(%arg0: i32) -> (i32, i32) {
    %c0_i32 = arith.constant 0 : i32
    %c0_i32_0 = arith.constant 0 : i32
    return %arg0, %c0_i32 : i32, i32
  }
  func.func @transform_1(%arg0: i32) -> (i32, i32) {
    %c0_i32 = arith.constant 0 : i32
    %c0_i32_0 = arith.constant 0 : i32
    return %arg0, %c0_i32 : i32, i32
  }
}

</mosaic_0001>

<llo_original>
// kernel: tpu_custom_call.1
$region0: #{tpu_custom_call.1}
  #allocation0 [shape = 'u32[]', space=smem, size = 0x4, offset = 0x4, fixed_abs, tag = 'smem constant byte address 0x4 - core index']
  #allocation1 [shape = 'u32[144,128]{1,0:T(1,128)}', space=vmem, size = 0x12000, scoped, tag = 'internal scratch']
  %s0 = inlined_call_operand.hbm [shape: f32[8,128], index: 0, kind: input, shape index: {}]
  %s1 = inlined_call_operand.hbm [shape: f32[8,128], index: 1, kind: output, shape index: {}]
  %s2 = sld [smem:[#allocation0]]
  $region18: #{tpu_custom_call.1} parent=0
    _
  %s4 = ssub.s32 1, %s2
  %s5 = scalar_select 0, %s4, %s2
  $region1: #{tpu_custom_call.1} parent=0
    #allocation2 [shape = 'u8[4096]{0}', space=vmem, size = 0x1000, scoped, tag = 'input window, operand 0, single buffered']
    #allocation3 [shape = 's32[1]{0}', space=sflag, size = 0x4, scoped, tag = 'scoped memory for tpu_custom_call.1']
    #allocation4 [shape = 's32[1]{0}', space=sflag, size = 0x4, scoped, tag = 'scoped memory for tpu_custom_call.1']
    #allocation5 [shape = 'u8[4096]{0}', space=vmem, size = 0x1000, scoped, tag = 'output window, operand 0, single buffered']
    %6 = vsyncpa [#allocation3], 0
    %7 = vsyncpa [#allocation4], 0
    // Predicated region
    $region2: #{tpu_custom_call.1} parent=1 // pred_check
      _
    $region3: #{tpu_custom_call.1} parent=1 // pred_check_branch
      %9 = sbr.rel (0) target = $region5
    $region4: #{tpu_custom_call.1} parent=1 // pred_region
      %s11 = ssub.s32 128, 128
      %12 = vsyncadd [#allocation3], %s11
      %s14 = sshll.u32 [#allocation2], 4
      %s15 = int_to_ptr.vmem [resolvable:$true] %s14
      %17 = dma.hbm_to_vmem [thread:$0]  %s0, 128, %s15, [#allocation3]
    $region5: #{tpu_custom_call.1} parent=1 // pred_fallthru
      _
    // Predicated region
    $region6: #{tpu_custom_call.1} parent=1 // pred_check
      _
    $region7: #{tpu_custom_call.1} parent=1 // pred_check_branch
      %19 = sbr.rel (0) target = $region9
    $region8: #{tpu_custom_call.1} parent=1 // pred_region
      %20 = dma.done [#allocation3], 128
    $region9: #{tpu_custom_call.1} parent=1 // pred_fallthru
      _
    %s21 = smul.u32 0, 8
    %s22 = scvt.s32.f32 %s21
    %v23 = vlaneseq
    %v24 = vshrl.u32 %v23, 7
    %v25 = vcvt.s32.f32 %v24
    %v26 = vstv %s22
    %v27 = vadd.f32 %v25, %v26
    %v28 = vmul.f32 %v27, 0.5
    %v29 = vrcp.pop 90.0
    %v30 = vmul.f32 %v28, %v29
    %v31 = vsub.f32 1.0, %v30
    %v32 = vld [vmem:[#allocation2] sm:$0xff]
    %v33 = vmul.f32 %v32, %v31
    %34 = vst [vmem:[#allocation5] sm:$0xff] %v33
    // Predicated region
    $region10: #{tpu_custom_call.1} parent=1 // pred_check
      _
    $region11: #{tpu_custom_call.1} parent=1 // pred_check_branch
      %36 = sbr.rel (0) target = $region13
    $region12: #{tpu_custom_call.1} parent=1 // pred_region
      %s38 = ssub.s32 128, 128
      %39 = vsyncadd [#allocation4], %s38
      %s41 = sshll.u32 [#allocation5], 4
      %s42 = int_to_ptr.vmem [resolvable:$true] %s41
      %44 = dma.vmem_to_hbm [thread:$0]  %s42, 128, %s1, [#allocation4]
    $region13: #{tpu_custom_call.1} parent=1 // pred_fallthru
      _
    // Predicated region
    $region14: #{tpu_custom_call.1} parent=1 // pred_check
      _
    $region15: #{tpu_custom_call.1} parent=1 // pred_check_branch
      %46 = sbr.rel (0) target = $region17
    $region16: #{tpu_custom_call.1} parent=1 // pred_region
      %47 = dma.done [#allocation4], 128
    $region17: #{tpu_custom_call.1} parent=1 // pred_fallthru
      _
    %48 = vsyncpa [#allocation3], 1
    %49 = vsyncpa [#allocation4], 1

</llo_original>
